<compile_context>
chip_gen: v5e
topology: v5e:2x2
jax: 0.10.0
libtpu: 0.0.40
codegen_flags: <defaults>
</compile_context>

<pallas_src>
import functools

import jax
import jax.numpy as jnp
from jax.experimental import pallas as pl
from jax.experimental.pallas import tpu as pltpu


def _round_up(n, m):
    return ((n + m - 1) // m) * m


def _cdiv(n, m):
    return (n + m - 1) // m


# ---------------------------------------------------------------------------
# Kernel: fused Linear(+folded BN) -> Tanh -> Linear(+folded BN) -> Tanh -> Linear
# on batch-packed (lane-dense) operands.  Dropout(0.5) is identity in eval mode.
# ---------------------------------------------------------------------------
def mlp_kernel(x_ref, w1_ref, b1_ref, w2_ref, b2_ref, w3_ref, b3_ref, out_ref):
    x = x_ref[...]
    if x.dtype != jnp.bfloat16:      # trace-time branch: bf16 callers skip the cast
        x = x.astype(jnp.bfloat16)

    h = jnp.dot(x, w1_ref[...], preferred_element_type=jnp.float32) + b1_ref[...]
    h = jnp.tanh(h)

    h = jnp.dot(h.astype(jnp.bfloat16), w2_ref[...],
                preferred_element_type=jnp.float32) + b2_ref[...]
    h = jnp.tanh(h)
    # Dropout(0.5) is identity in eval mode.

    y = jnp.dot(h.astype(jnp.bfloat16), w3_ref[...],
                preferred_element_type=jnp.float32) + b3_ref[...]
    out_ref[...] = y.astype(out_ref.dtype)


# ---------------------------------------------------------------------------
# Parameter folding / batch packing
# ---------------------------------------------------------------------------
def _choose_pack(in_dim, h1, h2, out_dim):
    """Batch-packing factor P: pack P rows per lane-row so K = P*in_dim == 128."""
    if in_dim <= 128 and 128 % in_dim == 0:
        p = 128 // in_dim
        # keep packed widths modest so block-diag weights / MXU N-passes stay small
        if p * max(in_dim, h1, h2, out_dim) <= 512:
            return p
    return 1


def fold_params_blockdiag(params, pack):
    """Fold eval-mode BN into the Linears and expand to block-diagonal packed form.

    (x @ W + b) * s + t == x @ (W*s) + (b*s + t);  block-diag = kron(I_pack, W).
    Weights -> bf16 (MXU fast path).  The off-diagonal zero blocks are exact in
    bf16, so packed numerics == per-row bf16-matmul / f32-accumulate numerics.
    """
    (w1, b1, s1, t1, w2, b2, s2, t2, w3, b3) = params
    w1f, b1f = w1 * s1, b1 * s1 + t1
    w2f, b2f = w2 * s2, b2 * s2 + t2

    def bd(w):
        return w if pack == 1 else jnp.kron(jnp.eye(pack, dtype=w.dtype), w)

    def rep(b):
        return b if pack == 1 else jnp.tile(b, (1, pack))

    return (bd(w1f).astype(jnp.bfloat16), rep(b1f).astype(jnp.float32),
            bd(w2f).astype(jnp.bfloat16), rep(b2f).astype(jnp.float32),
            bd(w3).astype(jnp.bfloat16),  rep(b3).astype(jnp.float32))


# ---------------------------------------------------------------------------
# Forward
# ---------------------------------------------------------------------------
@functools.partial(jax.jit, static_argnames=("tile_bp", "weight_buffers"))
def _mlp_forward(x, params, tile_bp=None, weight_buffers=2):
    B, in_dim = x.shape
    h1 = params[0].shape[1]
    h2 = params[4].shape[1]
    out_dim = params[8].shape[1]

    pack = _choose_pack(in_dim, h1, h2, out_dim)
    w1, b1, w2, b2, w3, b3 = fold_params_blockdiag(params, pack)
    kp, h1p = w1.shape
    h2p = w2.shape[1]
    outp = w3.shape[1]

    # --- batch tiling over packed rows --------------------------------------
    b_packed = _cdiv(B, pack)
    if tile_bp is None:
        if b_packed > 16:
            # >= 2 grid steps so the "parallel" axis can shard over v7x's 2 TCs
            # (could also be forced via pltpu.CORE_PARALLEL / pl.core_map);
            # cap at 1024 packed rows (= 8192 original rows) per tile.
            tile_bp = min(_round_up(_cdiv(b_packed, 2), 8), 1024)
        else:
            tile_bp = 8
    tile_bp = _round_up(max(int(tile_bp), 8), 8)
    b_packed_pad = _round_up(b_packed, tile_bp)

    rows_pad = b_packed_pad * pack
    if rows_pad != B:
        # padded zero rows flow through tanh(bias) (NaN-free) and are sliced off
        x = jnp.pad(x, ((0, rows_pad - B), (0, 0)))
    xp = x.reshape(b_packed_pad, kp)          # lane-dense: pack rows into lanes

    grid = (b_packed_pad // tile_bp,)
    itemsize = x.dtype.itemsize

    # Replicated (constant-index) weight/bias blocks.  Single-buffering (when
    # supported) halves their resident VMEM and drops redundant per-step DMA
    # descriptor work on the vector-misc slot.
    if weight_buffers == 1:
        rep_spec = lambda a: pl.BlockSpec(a.shape, lambda i: (0, 0),
                                          pipeline_mode=pl.Buffered(1))
    else:
        rep_spec = lambda a: pl.BlockSpec(a.shape, lambda i: (0, 0))

    # VMEM budget: double-buffered x/out tiles, weight/bias blocks, f32
    # activation temporaries; 2x headroom, 16 MiB floor, 48 MiB cap (leaves
    # >= 16 MiB of v7x's 64 MiB per-core VMEM for Mosaic internal scratch).
    bytes_weights = (weight_buffers * 2 * (w1.size + w2.size + w3.size)
                     + weight_buffers * 4 * (b1.size + b2.size + b3.size))
    bytes_io = 2 * itemsize * tile_bp * (kp + outp)
    bytes_act = 4 * 4 * tile_bp * max(h1p, h2p, outp)
    vmem_limit = int(min(max(2 * (bytes_weights + bytes_io + bytes_act),
                             16 * 1024 * 1024),
                         48 * 1024 * 1024))

    cost = pl.CostEstimate(
        flops=2 * b_packed_pad * (kp * h1p + h1p * h2p + h2p * outp),
        transcendentals=b_packed_pad * (h1p + h2p),
        bytes_accessed=(b_packed_pad * kp * itemsize
                        + 2 * (w1.size + w2.size + w3.size)
                        + 4 * (b1.size + b2.size + b3.size)
                        + b_packed_pad * outp * itemsize),
    )

    out = pl.pallas_call(
        mlp_kernel,
        out_shape=jax.ShapeDtypeStruct((b_packed_pad, outp), x.dtype),
        grid_spec=pltpu.PrefetchScalarGridSpec(
            num_scalar_prefetch=0,
            grid=grid,
            in_specs=[
                pl.BlockSpec((tile_bp, kp), lambda i: (i, 0)),   # packed x tile
                rep_spec(w1), rep_spec(b1),
                rep_spec(w2), rep_spec(b2),
                rep_spec(w3), rep_spec(b3),
            ],
            out_specs=pl.BlockSpec((tile_bp, outp), lambda i: (i, 0)),
        ),
        compiler_params=pltpu.CompilerParams(
            dimension_semantics=("parallel",),
            vmem_limit_bytes=vmem_limit),
        cost_estimate=cost,
    )(xp, w1, b1, w2, b2, w3, b3)

    # un-pack: (b_packed_pad, pack*out_dim) -> (rows_pad, out_dim) -> [:B]
    return out.reshape(rows_pad, out_dim)[:B]


_WEIGHT_BUFFERS_CACHE = [None]   # 1 if pl.Buffered(1) lowers on this JAX, else 2


def mlp_forward(x, params, tile_bp=None):
    """Fused eval-mode MLP forward; probes single-buffered-weight support once."""
    if _WEIGHT_BUFFERS_CACHE[0] is None:
        try:
            out = _mlp_forward(x, params, tile_bp=tile_bp, weight_buffers=1)
            jax.block_until_ready(out)
            _WEIGHT_BUFFERS_CACHE[0] = 1
            return out
        except Exception:
            # pl.Buffered(1) single-buffering unsupported -> default buffering
            _WEIGHT_BUFFERS_CACHE[0] = 2
    return _mlp_forward(x, params, tile_bp=tile_bp,
                        weight_buffers=_WEIGHT_BUFFERS_CACHE[0])


# ---------------------------------------------------------------------------
# Synthetic parameters + references
# ---------------------------------------------------------------------------
def init_params(key, input_size, hidden_sizes, output_size, eps=1e-5):
    """Deterministic synthetic parameters (shapes match the PyTorch module)."""
    dims = [input_size] + list(hidden_sizes) + [output_size]
    keys = jax.random.split(key, 16)
    ki = iter(keys)

    def linear(in_d, out_d):
        bound = 1.0 / jnp.sqrt(in_d)
        w = jax.random.uniform(next(ki), (in_d, out_d), jnp.float32, -bound, bound)
        b = jax.random.uniform(next(ki), (1, out_d), jnp.float32, -bound, bound)
        return w, b

    def bn_affine(d):
        gamma = 1.0 + 0.1 * jax.random.normal(next(ki), (1, d), jnp.float32)
        beta = 0.1 * jax.random.normal(next(ki), (1, d), jnp.float32)
        running_mean = 0.05 * jax.random.normal(next(ki), (1, d), jnp.float32)
        running_var = jnp.abs(1.0 + 0.1 * jax.random.normal(next(ki), (1, d), jnp.float32))
        scale = gamma / jnp.sqrt(running_var + eps)
        shift = beta - running_mean * scale
        return scale, shift

    w1, b1 = linear(dims[0], dims[1])
    s1, t1 = bn_affine(dims[1])
    w2, b2 = linear(dims[1], dims[2])
    s2, t2 = bn_affine(dims[2])
    w3, b3 = linear(dims[2], dims[3])
    return (w1, b1, s1, t1, w2, b2, s2, t2, w3, b3)


def mlp_reference_f32(x, params):
    """Pure f32 reference (unfused, unquantized)."""
    (w1, b1, s1, t1, w2, b2, s2, t2, w3, b3) = params
    h = jnp.tanh((x @ w1 + b1) * s1 + t1)
    h = jnp.tanh((h @ w2 + b2) * s2 + t2)
    return h @ w3 + b3


def mlp_reference_matched(x, params):
    """Reference matching the kernel numerics (BN folded, bf16 operands, f32 acc)."""
    (w1, b1, s1, t1, w2, b2, s2, t2, w3, b3) = params
    w1f, b1f = (w1 * s1).astype(jnp.bfloat16), b1 * s1 + t1
    w2f, b2f = (w2 * s2).astype(jnp.bfloat16), b2 * s2 + t2
    w3f = w3.astype(jnp.bfloat16)
    h = jnp.tanh(jnp.dot(x.astype(jnp.bfloat16), w1f,
                         preferred_element_type=jnp.float32) + b1f)
    h = jnp.tanh(jnp.dot(h.astype(jnp.bfloat16), w2f,
                         preferred_element_type=jnp.float32) + b2f)
    return jnp.dot(h.astype(jnp.bfloat16), w3f,
                   preferred_element_type=jnp.float32) + b3


if __name__ == "__main__":
    key = jax.random.PRNGKey(0)
    kx, kparams = jax.random.split(key)

    input_size = 16
    hidden_sizes = [32, 32]
    output_size = 4
    params = init_params(kparams, input_size, hidden_sizes, output_size)

    # Case 1: small f32 batch -> one packed tile, grid=(1,).
    B = 16
    x = jax.random.normal(kx, (B, input_size), jnp.float32)
    out = jax.block_until_ready(mlp_forward(x, params))
    assert out.shape == (B, output_size)

    ref_matched = mlp_reference_matched(x, params)
    ref_f32 = mlp_reference_f32(x, params)
    assert jnp.allclose(out, ref_matched, atol=5e-3, rtol=5e-3), "mismatch vs matched ref"
    # loose check vs pure-f32 reference (bf16 weight/activation quantization error)
    assert jnp.allclose(out, ref_f32, atol=1e-1, rtol=1e-1), "mismatch vs f32 ref"

    # Case 2: ragged bf16 batch, multi-step grid (padding / tiling / bf16 path).
    B2 = 67
    x2 = jax.random.normal(jax.random.PRNGKey(1), (B2, input_size), jnp.bfloat16)
    out2 = jax.block_until_ready(mlp_forward(x2, params, tile_bp=8))
    assert out2.shape == (B2, output_size)
    ref2 = mlp_reference_matched(x2.astype(jnp.float32), params)
    assert jnp.allclose(out2.astype(jnp.float32), ref2, atol=2e-2, rtol=2e-2), \
        "mismatch on ragged bf16 batch"

    print("KERNEL_OK")
</pallas_src>

<mosaic_0001>
module attributes {stable_mosaic.version = 11 : i64} {
  func.func @mlp_kernel(%arg0: i32, %arg1: memref<8x128xf32, #tpu.memory_space<vmem>>, %arg2: memref<128x256xbf16, #tpu.memory_space<vmem>>, %arg3: memref<1x256xf32, #tpu.memory_space<vmem>>, %arg4: memref<256x256xbf16, #tpu.memory_space<vmem>>, %arg5: memref<1x256xf32, #tpu.memory_space<vmem>>, %arg6: memref<256x32xbf16, #tpu.memory_space<vmem>>, %arg7: memref<1x32xf32, #tpu.memory_space<vmem>>, %arg8: memref<8x32xf32, #tpu.memory_space<vmem>>) attributes {dimension_semantics = [#tpu.dimension_semantics<parallel>], iteration_bounds = array<i64: 1>, scalar_prefetch = 0 : i64, scratch_operands = 0 : i64, tpu.core_type = #tpu.core_type<tc>, window_params = [{transform_indices = @transform_0, window_bounds = array<i64: 8, 128>}, {pipeline_mode = #tpu.pipeline_mode<synchronous>, transform_indices = @transform_1, window_bounds = array<i64: 128, 256>}, {pipeline_mode = #tpu.pipeline_mode<synchronous>, transform_indices = @transform_2, window_bounds = array<i64: 1, 256>}, {pipeline_mode = #tpu.pipeline_mode<synchronous>, transform_indices = @transform_3, window_bounds = array<i64: 256, 256>}, {pipeline_mode = #tpu.pipeline_mode<synchronous>, transform_indices = @transform_4, window_bounds = array<i64: 1, 256>}, {pipeline_mode = #tpu.pipeline_mode<synchronous>, transform_indices = @transform_5, window_bounds = array<i64: 256, 32>}, {pipeline_mode = #tpu.pipeline_mode<synchronous>, transform_indices = @transform_6, window_bounds = array<i64: 1, 32>}, {transform_indices = @transform_7, window_bounds = array<i64: 8, 32>}]} {
    %c0 = arith.constant 0 : index
    %c0_0 = arith.constant 0 : index
    %0 = vector.load %arg1[%c0, %c0_0] : memref<8x128xf32, #tpu.memory_space<vmem>>, vector<8x128xf32>
    %1 = arith.truncf %0 : vector<8x128xf32> to vector<8x128xbf16>
    %c0_1 = arith.constant 0 : index
    %c0_2 = arith.constant 0 : index
    %2 = vector.load %arg2[%c0_1, %c0_2] : memref<128x256xbf16, #tpu.memory_space<vmem>>, vector<128x256xbf16>
    %cst = arith.constant dense<0.000000e+00> : vector<8x256xf32>
    %3 = tpu.matmul %1, %2, %cst {dimension_numbers = #tpu.dot_dimension_numbers<[1], [0], [0], [1], [0, 0, 1, 1], [], []>} : vector<8x128xbf16>, vector<128x256xbf16>, vector<8x256xf32> -> vector<8x256xf32>
    %c0_3 = arith.constant 0 : index
    %c0_4 = arith.constant 0 : index
    %4 = vector.load %arg3[%c0_3, %c0_4] : memref<1x256xf32, #tpu.memory_space<vmem>>, vector<1x256xf32>
    %5 = vector.broadcast %4 : vector<1x256xf32> to vector<8x256xf32>
    %6 = arith.addf %3, %5 : vector<8x256xf32>
    %7 = math.tanh %6 : vector<8x256xf32>
    %8 = arith.truncf %7 : vector<8x256xf32> to vector<8x256xbf16>
    %c0_5 = arith.constant 0 : index
    %c0_6 = arith.constant 0 : index
    %9 = vector.load %arg4[%c0_5, %c0_6] : memref<256x256xbf16, #tpu.memory_space<vmem>>, vector<256x256xbf16>
    %cst_7 = arith.constant dense<0.000000e+00> : vector<8x256xf32>
    %10 = tpu.matmul %8, %9, %cst_7 {dimension_numbers = #tpu.dot_dimension_numbers<[1], [0], [0], [1], [0, 0, 1, 1], [], []>} : vector<8x256xbf16>, vector<256x256xbf16>, vector<8x256xf32> -> vector<8x256xf32>
    %c0_8 = arith.constant 0 : index
    %c0_9 = arith.constant 0 : index
    %11 = vector.load %arg5[%c0_8, %c0_9] : memref<1x256xf32, #tpu.memory_space<vmem>>, vector<1x256xf32>
    %12 = vector.broadcast %11 : vector<1x256xf32> to vector<8x256xf32>
    %13 = arith.addf %10, %12 : vector<8x256xf32>
    %14 = math.tanh %13 : vector<8x256xf32>
    %15 = arith.truncf %14 : vector<8x256xf32> to vector<8x256xbf16>
    %c0_10 = arith.constant 0 : index
    %c0_11 = arith.constant 0 : index
    %16 = vector.load %arg6[%c0_10, %c0_11] : memref<256x32xbf16, #tpu.memory_space<vmem>>, vector<256x32xbf16>
    %cst_12 = arith.constant dense<0.000000e+00> : vector<8x32xf32>
    %17 = tpu.matmul %15, %16, %cst_12 {dimension_numbers = #tpu.dot_dimension_numbers<[1], [0], [0], [1], [0, 0, 1, 1], [], []>} : vector<8x256xbf16>, vector<256x32xbf16>, vector<8x32xf32> -> vector<8x32xf32>
    %c0_13 = arith.constant 0 : index
    %c0_14 = arith.constant 0 : index
    %18 = vector.load %arg7[%c0_13, %c0_14] : memref<1x32xf32, #tpu.memory_space<vmem>>, vector<1x32xf32>
    %19 = vector.broadcast %18 : vector<1x32xf32> to vector<8x32xf32>
    %20 = arith.addf %17, %19 : vector<8x32xf32>
    %c0_15 = arith.constant 0 : index
    %c0_16 = arith.constant 0 : index
    %21 = vector.load %arg8[%c0_15, %c0_16] : memref<8x32xf32, #tpu.memory_space<vmem>>, vector<8x32xf32>
    tpu.vector_store %arg8[%c0_15, %c0_16], %20 {strides = array<i32>} : memref<8x32xf32, #tpu.memory_space<vmem>>, vector<8x32xf32>,
    return
  }
  func.func @transform_0(%arg0: i32) -> (i32, i32) {
    %c0_i32 = arith.constant 0 : i32
    %c0_i32_0 = arith.constant 0 : i32
    return %arg0, %c0_i32 : i32, i32
  }
  func.func @transform_1(%arg0: i32) -> (i32, i32) {
    %c0_i32 = arith.constant 0 : i32
    %c0_i32_0 = arith.constant 0 : i32
    %c0_i32_1 = arith.constant 0 : i32
    return %c0_i32, %c0_i32_0 : i32, i32
  }
  func.func @transform_2(%arg0: i32) -> (i32, i32) {
    %c0_i32 = arith.constant 0 : i32
    %c0_i32_0 = arith.constant 0 : i32
    %c0_i32_1 = arith.constant 0 : i32
    return %c0_i32, %c0_i32_0 : i32, i32
  }
  func.func @transform_3(%arg0: i32) -> (i32, i32) {
    %c0_i32 = arith.constant 0 : i32
    %c0_i32_0 = arith.constant 0 : i32
    %c0_i32_1 = arith.constant 0 : i32
    return %c0_i32, %c0_i32_0 : i32, i32
  }
  func.func @transform_4(%arg0: i32) -> (i32, i32) {
    %c0_i32 = arith.constant 0 : i32
    %c0_i32_0 = arith.constant 0 : i32
    %c0_i32_1 = arith.constant 0 : i32
    return %c0_i32, %c0_i32_0 : i32, i32
  }
  func.func @transform_5(%arg0: i32) -> (i32, i32) {
    %c0_i32 = arith.constant 0 : i32
    %c0_i32_0 = arith.constant 0 : i32
    %c0_i32_1 = arith.constant 0 : i32
    return %c0_i32, %c0_i32_0 : i32, i32
  }
  func.func @transform_6(%arg0: i32) -> (i32, i32) {
    %c0_i32 = arith.constant 0 : i32
    %c0_i32_0 = arith.constant 0 : i32
    %c0_i32_1 = arith.constant 0 : i32
    return %c0_i32, %c0_i32_0 : i32, i32
  }
  func.func @transform_7(%arg0: i32) -> (i32, i32) {
    %c0_i32 = arith.constant 0 : i32
    %c0_i32_0 = arith.constant 0 : i32
    return %arg0, %c0_i32 : i32, i32
  }
}

module attributes {stable_mosaic.version = 11 : i64} {
  func.func @mlp_kernel(%arg0: i32, %arg1: memref<8x128xf32, #tpu.memory_space<vmem>>, %arg2: memref<128x256xbf16, #tpu.memory_space<vmem>>, %arg3: memref<1x256xf32, #tpu.memory_space<vmem>>, %arg4: memref<256x256xbf16, #tpu.memory_space<vmem>>, %arg5: memref<1x256xf32, #tpu.memory_space<vmem>>, %arg6: memref<256x32xbf16, #tpu.memory_space<vmem>>, %arg7: memref<1x32xf32, #tpu.memory_space<vmem>>, %arg8: memref<8x32xf32, #tpu.memory_space<vmem>>) attributes {dimension_semantics = [#tpu.dimension_semantics<parallel>], iteration_bounds = array<i64: 1>, scalar_prefetch = 0 : i64, scratch_operands = 0 : i64, tpu.core_type = #tpu.core_type<tc>, window_params = [{transform_indices = @transform_0, window_bounds = array<i64: 8, 128>}, {pipeline_mode = #tpu.pipeline_mode<synchronous>, transform_indices = @transform_1, window_bounds = array<i64: 128, 256>}, {pipeline_mode = #tpu.pipeline_mode<synchronous>, transform_indices = @transform_2, window_bounds = array<i64: 1, 256>}, {pipeline_mode = #tpu.pipeline_mode<synchronous>, transform_indices = @transform_3, window_bounds = array<i64: 256, 256>}, {pipeline_mode = #tpu.pipeline_mode<synchronous>, transform_indices = @transform_4, window_bounds = array<i64: 1, 256>}, {pipeline_mode = #tpu.pipeline_mode<synchronous>, transform_indices = @transform_5, window_bounds = array<i64: 256, 32>}, {pipeline_mode = #tpu.pipeline_mode<synchronous>, transform_indices = @transform_6, window_bounds = array<i64: 1, 32>}, {transform_indices = @transform_7, window_bounds = array<i64: 8, 32>}]} {
    %c0 = arith.constant 0 : index
    %c0_0 = arith.constant 0 : index
    %0 = vector.load %arg1[%c0, %c0_0] : memref<8x128xf32, #tpu.memory_space<vmem>>, vector<8x128xf32>
    %1 = arith.truncf %0 : vector<8x128xf32> to vector<8x128xbf16>
    %c0_1 = arith.constant 0 : index
    %c0_2 = arith.constant 0 : index
    %2 = vector.load %arg2[%c0_1, %c0_2] : memref<128x256xbf16, #tpu.memory_space<vmem>>, vector<128x256xbf16>
    %cst = arith.constant dense<0.000000e+00> : vector<8x256xf32>
    %3 = tpu.matmul %1, %2, %cst {dimension_numbers = #tpu.dot_dimension_numbers<[1], [0], [0], [1], [0, 0, 1, 1], [], []>} : vector<8x128xbf16>, vector<128x256xbf16>, vector<8x256xf32> -> vector<8x256xf32>
    %c0_3 = arith.constant 0 : index
    %c0_4 = arith.constant 0 : index
    %4 = vector.load %arg3[%c0_3, %c0_4] : memref<1x256xf32, #tpu.memory_space<vmem>>, vector<1x256xf32>
    %5 = vector.broadcast %4 : vector<1x256xf32> to vector<8x256xf32>
    %6 = arith.addf %3, %5 : vector<8x256xf32>
    %7 = math.tanh %6 : vector<8x256xf32>
    %8 = arith.truncf %7 : vector<8x256xf32> to vector<8x256xbf16>
    %c0_5 = arith.constant 0 : index
    %c0_6 = arith.constant 0 : index
    %9 = vector.load %arg4[%c0_5, %c0_6] : memref<256x256xbf16, #tpu.memory_space<vmem>>, vector<256x256xbf16>
    %cst_7 = arith.constant dense<0.000000e+00> : vector<8x256xf32>
    %10 = tpu.matmul %8, %9, %cst_7 {dimension_numbers = #tpu.dot_dimension_numbers<[1], [0], [0], [1], [0, 0, 1, 1], [], []>} : vector<8x256xbf16>, vector<256x256xbf16>, vector<8x256xf32> -> vector<8x256xf32>
    %c0_8 = arith.constant 0 : index
    %c0_9 = arith.constant 0 : index
    %11 = vector.load %arg5[%c0_8, %c0_9] : memref<1x256xf32, #tpu.memory_space<vmem>>, vector<1x256xf32>
    %12 = vector.broadcast %11 : vector<1x256xf32> to vector<8x256xf32>
    %13 = arith.addf %10, %12 : vector<8x256xf32>
    %14 = math.tanh %13 : vector<8x256xf32>
    %15 = arith.truncf %14 : vector<8x256xf32> to vector<8x256xbf16>
    %c0_10 = arith.constant 0 : index
    %c0_11 = arith.constant 0 : index
    %16 = vector.load %arg6[%c0_10, %c0_11] : memref<256x32xbf16, #tpu.memory_space<vmem>>, vector<256x32xbf16>
    %cst_12 = arith.constant dense<0.000000e+00> : vector<8x32xf32>
    %17 = tpu.matmul %15, %16, %cst_12 {dimension_numbers = #tpu.dot_dimension_numbers<[1], [0], [0], [1], [0, 0, 1, 1], [], []>} : vector<8x256xbf16>, vector<256x32xbf16>, vector<8x32xf32> -> vector<8x32xf32>
    %c0_13 = arith.constant 0 : index
    %c0_14 = arith.constant 0 : index
    %18 = vector.load %arg7[%c0_13, %c0_14] : memref<1x32xf32, #tpu.memory_space<vmem>>, vector<1x32xf32>
    %19 = vector.broadcast %18 : vector<1x32xf32> to vector<8x32xf32>
    %20 = arith.addf %17, %19 : vector<8x32xf32>
    %c0_15 = arith.constant 0 : index
    %c0_16 = arith.constant 0 : index
    %21 = vector.load %arg8[%c0_15, %c0_16] : memref<8x32xf32, #tpu.memory_space<vmem>>, vector<8x32xf32>
    tpu.vector_store %arg8[%c0_15, %c0_16], %20 {strides = array<i32>} : memref<8x32xf32, #tpu.memory_space<vmem>>, vector<8x32xf32>,
    return
  }
  func.func @transform_0(%arg0: i32) -> (i32, i32) {
    %c0_i32 = arith.constant 0 : i32
    %c0_i32_0 = arith.constant 0 : i32
    return %arg0, %c0_i32 : i32, i32
  }
  func.func @transform_1(%arg0: i32) -> (i32, i32) {
    %c0_i32 = arith.constant 0 : i32
    %c0_i32_0 = arith.constant 0 : i32
    %c0_i32_1 = arith.constant 0 : i32
    return %c0_i32, %c0_i32_0 : i32, i32
  }
  func.func @transform_2(%arg0: i32) -> (i32, i32) {
    %c0_i32 = arith.constant 0 : i32
    %c0_i32_0 = arith.constant 0 : i32
    %c0_i32_1 = arith.constant 0 : i32
    return %c0_i32, %c0_i32_0 : i32, i32
  }
  func.func @transform_3(%arg0: i32) -> (i32, i32) {
    %c0_i32 = arith.constant 0 : i32
    %c0_i32_0 = arith.constant 0 : i32
    %c0_i32_1 = arith.constant 0 : i32
    return %c0_i32, %c0_i32_0 : i32, i32
  }
  func.func @transform_4(%arg0: i32) -> (i32, i32) {
    %c0_i32 = arith.constant 0 : i32
    %c0_i32_0 = arith.constant 0 : i32
    %c0_i32_1 = arith.constant 0 : i32
    return %c0_i32, %c0_i32_0 : i32, i32
  }
  func.func @transform_5(%arg0: i32) -> (i32, i32) {
    %c0_i32 = arith.constant 0 : i32
    %c0_i32_0 = arith.constant 0 : i32
    %c0_i32_1 = arith.constant 0 : i32
    return %c0_i32, %c0_i32_0 : i32, i32
  }
  func.func @transform_6(%arg0: i32) -> (i32, i32) {
    %c0_i32 = arith.constant 0 : i32
    %c0_i32_0 = arith.constant 0 : i32
    %c0_i32_1 = arith.constant 0 : i32
    return %c0_i32, %c0_i32_0 : i32, i32
  }
  func.func @transform_7(%arg0: i32) -> (i32, i32) {
    %c0_i32 = arith.constant 0 : i32
    %c0_i32_0 = arith.constant 0 : i32
    return %arg0, %c0_i32 : i32, i32
  }
}

</mosaic_0001>

<llo_original>
// kernel: _mlp_forward.1
$region0: #{_mlp_forward.1}
  #allocation0 [shape = 'u32[]', space=smem, size = 0x4, offset = 0x4, fixed_abs, tag = 'smem constant byte address 0x4 - core index']
  #allocation1 [shape = 'u32[72,128]{1,0:T(1,128)}', space=vmem, size = 0x9000, scoped, tag = 'internal scratch']
  %s0 = inlined_call_operand.vmem [shape: f32[8,128], index: 0, kind: input, shape index: {}]
  %s1 = inlined_call_operand.vmem [shape: bf16[128,256], index: 1, kind: input, shape index: {}]
  %s2 = inlined_call_operand.vmem [shape: f32[1,256], index: 2, kind: input, shape index: {}]
  %s3 = inlined_call_operand.vmem [shape: bf16[256,256], index: 3, kind: input, shape index: {}]
  %s4 = inlined_call_operand.vmem [shape: f32[1,256], index: 4, kind: input, shape index: {}]
  %s5 = inlined_call_operand.vmem [shape: bf16[256,32], index: 5, kind: input, shape index: {}]
  %s6 = inlined_call_operand.vmem [shape: f32[1,32], index: 6, kind: input, shape index: {}]
  %s7 = inlined_call_operand.vmem [shape: f32[8,32], index: 7, kind: output, shape index: {}]
  %s8 = sld [smem:[#allocation0]]
  $region38: #{_mlp_forward.1} parent=0
    _
  %s10 = ssub.s32 1, %s8
  %s11 = scalar_select 0, %s10, %s8
  // Predicated region
  $region2: #{_mlp_forward.1} parent=0 // pred_check
    _
  $region3: #{_mlp_forward.1} parent=0 // pred_check_branch
    %13 = sbr.rel (0) target = $region5
  $region4: #{_mlp_forward.1} parent=0 // pred_region
    _
  $region5: #{_mlp_forward.1} parent=0 // pred_fallthru
    _
  // Predicated region
  $region6: #{_mlp_forward.1} parent=0 // pred_check
    _
  $region7: #{_mlp_forward.1} parent=0 // pred_check_branch
    %15 = sbr.rel (0) target = $region9
  $region8: #{_mlp_forward.1} parent=0 // pred_region
    _
  $region9: #{_mlp_forward.1} parent=0 // pred_fallthru
    _
  // Predicated region
  $region10: #{_mlp_forward.1} parent=0 // pred_check
    _
  $region11: #{_mlp_forward.1} parent=0 // pred_check_branch
    %17 = sbr.rel (0) target = $region13
  $region12: #{_mlp_forward.1} parent=0 // pred_region
    _
  $region13: #{_mlp_forward.1} parent=0 // pred_fallthru
    _
  // Predicated region
  $region14: #{_mlp_forward.1} parent=0 // pred_check
    _
  $region15: #{_mlp_forward.1} parent=0 // pred_check_branch
    %19 = sbr.rel (0) target = $region17
  $region16: #{_mlp_forward.1} parent=0 // pred_region
    _
  $region17: #{_mlp_forward.1} parent=0 // pred_fallthru
    _
  // Predicated region
  $region18: #{_mlp_forward.1} parent=0 // pred_check
    _
  $region19: #{_mlp_forward.1} parent=0 // pred_check_branch
    %21 = sbr.rel (0) target = $region21
  $region20: #{_mlp_forward.1} parent=0 // pred_region
    _
  $region21: #{_mlp_forward.1} parent=0 // pred_fallthru
    _
  // Predicated region
  $region22: #{_mlp_forward.1} parent=0 // pred_check
    _
  $region23: #{_mlp_forward.1} parent=0 // pred_check_branch
    %23 = sbr.rel (0) target = $region25
  $region24: #{_mlp_forward.1} parent=0 // pred_region
    _
  $region25: #{_mlp_forward.1} parent=0 // pred_fallthru
    _
  // Predicated region
  $region26: #{_mlp_forward.1} parent=0 // pred_check
    _
  $region27: #{_mlp_forward.1} parent=0 // pred_check_branch
    %25 = sbr.rel (0) target = $region29
  $region28: #{_mlp_forward.1} parent=0 // pred_region
    _
  $region29: #{_mlp_forward.1} parent=0 // pred_fallthru
    _
  %v26 = vld [vmem:[%s0] sm:$0xff]
  %v27 = vpack.c.bf16 %v26, %v26
  %v28 = vld [vmem:[%s1] sm:$0xff]
  %v29 = vld [vmem:[%s1 + $0x8] sm:$0xff]
  %v30 = vld [vmem:[%s1 + $0x10] sm:$0xff]
  %v31 = vld [vmem:[%s1 + $0x18] sm:$0xff]
  %v32 = vld [vmem:[%s1 + $0x20] sm:$0xff]
  %v33 = vld [vmem:[%s1 + $0x28] sm:$0xff]
  %v34 = vld [vmem:[%s1 + $0x30] sm:$0xff]
  %v35 = vld [vmem:[%s1 + $0x38] sm:$0xff]
  %v36 = vld [vmem:[%s1 + $0x40] sm:$0xff]
  %v37 = vld [vmem:[%s1 + $0x48] sm:$0xff]
  %v38 = vld [vmem:[%s1 + $0x50] sm:$0xff]
  %v39 = vld [vmem:[%s1 + $0x58] sm:$0xff]
  %v40 = vld [vmem:[%s1 + $0x60] sm:$0xff]
  %v41 = vld [vmem:[%s1 + $0x68] sm:$0xff]
  %v42 = vld [vmem:[%s1 + $0x70] sm:$0xff]
  %v43 = vld [vmem:[%s1 + $0x78] sm:$0xff]
  %v44 = vld [vmem:[%s2] sm:$0x3]
  %v46 = vperm.slane %v44, 0
  %v47 = vperm.slane %v44, 1
  %v66 = vunpack.c.l.b16 %v28
  %v67 = vunpack.c.h.b16 %v28
  %v68 = vunpack.c.l.b16 %v29
  %v69 = vunpack.c.h.b16 %v29
  %v70 = vunpack.c.l.b16 %v30
  %v71 = vunpack.c.h.b16 %v30
  %v72 = vunpack.c.l.b16 %v31
  %v73 = vunpack.c.h.b16 %v31
  %v74 = vunpack.c.l.b16 %v32
  %v75 = vunpack.c.h.b16 %v32
  %v76 = vunpack.c.l.b16 %v33
  %v77 = vunpack.c.h.b16 %v33
  %v78 = vunpack.c.l.b16 %v34
  %v79 = vunpack.c.h.b16 %v34
  %v80 = vunpack.c.l.b16 %v35
  %v81 = vunpack.c.h.b16 %v35
  %v82 = vunpack.c.l.b16 %v36
  %v83 = vunpack.c.h.b16 %v36
  %v84 = vunpack.c.l.b16 %v37
  %v85 = vunpack.c.h.b16 %v37
  %v86 = vunpack.c.l.b16 %v38
  %v87 = vunpack.c.h.b16 %v38
  %v88 = vunpack.c.l.b16 %v39
  %v89 = vunpack.c.h.b16 %v39
  %v90 = vunpack.c.l.b16 %v40
  %v91 = vunpack.c.h.b16 %v40
  %v92 = vunpack.c.l.b16 %v41
  %v93 = vunpack.c.h.b16 %v41
  %v94 = vunpack.c.l.b16 %v42
  %v95 = vunpack.c.h.b16 %v42
  %v96 = vunpack.c.l.b16 %v43
  %v97 = vunpack.c.h.b16 %v43
  %v98 = vpack.c.b16 %v68, %v66
  %v99 = vpack.c.b16 %v69, %v67
  %v100 = vpack.c.b16 %v72, %v70
  %v101 = vpack.c.b16 %v73, %v71
  %v102 = vpack.c.b16 %v76, %v74
  %v103 = vpack.c.b16 %v77, %v75
  %v104 = vpack.c.b16 %v80, %v78
  %v105 = vpack.c.b16 %v81, %v79
  %v106 = vpack.c.b16 %v84, %v82
  %v107 = vpack.c.b16 %v85, %v83
  %v108 = vpack.c.b16 %v88, %v86
  %v109 = vpack.c.b16 %v89, %v87
  %v110 = vpack.c.b16 %v92, %v90
  %v111 = vpack.c.b16 %v93, %v91
  %v112 = vpack.c.b16 %v96, %v94
  %v113 = vpack.c.b16 %v97, %v95
  %130 = vmatpush.bf16.msra.mxu0 %v112
  %131 = vmatpush.bf16.msra.mxu0 %v110
  %132 = vmatpush.bf16.msra.mxu0 %v108
  %133 = vmatpush.bf16.msra.mxu0 %v106
  %134 = vmatpush.bf16.msra.mxu0 %v104
  %135 = vmatpush.bf16.msra.mxu0 %v102
  %136 = vmatpush.bf16.msra.mxu0 %v100
  %137 = vmatpush.bf16.msra.mxu0 %v98
  %138 = vmatmul.bf16.gmra.mxu0 %v27
  %v139 = vpop.f32.mrf.mxu0
  %v140 = vadd.f32 %v46, %v139
  %v141 = vpop.f32.mrf.mxu0
  %142 = vdwg.mxu0
  %143 = vmatpush.bf16.msra.mxu0 %v113
  %144 = vmatpush.bf16.msra.mxu0 %v111
  %145 = vmatpush.bf16.msra.mxu0 %v109
  %146 = vmatpush.bf16.msra.mxu0 %v107
  %147 = vmatpush.bf16.msra.mxu0 %v105
  %148 = vmatpush.bf16.msra.mxu0 %v103
  %149 = vmatpush.bf16.msra.mxu0 %v101
  %150 = vmatpush.bf16.msra.mxu0 %v99
  %151 = vmatmul.bf16.gmra.mxu0 %v27
  %v152 = vpop.f32.mrf.mxu0
  %v153 = vadd.f32 %v47, %v152
  %v154 = vpop.f32.mrf.mxu0
  %155 = vdwg.mxu0
  %v156 = vtanh.pop %v140
  %v157 = vtanh.pop %v153
  %v158 = vpack.c.bf16 %v156, %v156
  %v159 = vpack.c.bf16 %v157, %v157
  %v160 = vld [vmem:[%s3] sm:$0xff]
  %v161 = vld [vmem:[%s3 + $0x8] sm:$0xff]
  %v162 = vld [vmem:[%s3 + $0x10] sm:$0xff]
  %v163 = vld [vmem:[%s3 + $0x18] sm:$0xff]
  %v164 = vld [vmem:[%s3 + $0x20] sm:$0xff]
  %v165 = vld [vmem:[%s3 + $0x28] sm:$0xff]
  %v166 = vld [vmem:[%s3 + $0x30] sm:$0xff]
  %v167 = vld [vmem:[%s3 + $0x38] sm:$0xff]
  %v168 = vld [vmem:[%s3 + $0x40] sm:$0xff]
  %v169 = vld [vmem:[%s3 + $0x48] sm:$0xff]
  %v170 = vld [vmem:[%s3 + $0x50] sm:$0xff]
  %v171 = vld [vmem:[%s3 + $0x58] sm:$0xff]
  %v172 = vld [vmem:[%s3 + $0x60] sm:$0xff]
  %v173 = vld [vmem:[%s3 + $0x68] sm:$0xff]
  %v174 = vld [vmem:[%s3 + $0x70] sm:$0xff]
  %v175 = vld [vmem:[%s3 + $0x78] sm:$0xff]
  %v176 = vld [vmem:[%s3 + $0x80] sm:$0xff]
  %v177 = vld [vmem:[%s3 + $0x88] sm:$0xff]
  %v178 = vld [vmem:[%s3 + $0x90] sm:$0xff]
  %v179 = vld [vmem:[%s3 + $0x98] sm:$0xff]
  %v180 = vld [vmem:[%s3 + $0xa0] sm:$0xff]
  %v181 = vld [vmem:[%s3 + $0xa8] sm:$0xff]
  %v182 = vld [vmem:[%s3 + $0xb0] sm:$0xff]
  %v183 = vld [vmem:[%s3 + $0xb8] sm:$0xff]
  %v184 = vld [vmem:[%s3 + $0xc0] sm:$0xff]
  %v185 = vld [vmem:[%s3 + $0xc8] sm:$0xff]
  %v186 = vld [vmem:[%s3 + $0xd0] sm:$0xff]
  %v187 = vld [vmem:[%s3 + $0xd8] sm:$0xff]
  %v188 = vld [vmem:[%s3 + $0xe0] sm:$0xff]
  %v189 = vld [vmem:[%s3 + $0xe8] sm:$0xff]
  %v190 = vld [vmem:[%s3 + $0xf0] sm:$0xff]
  %v191 = vld [vmem:[%s3 + $0xf8] sm:$0xff]
  %v192 = vld [vmem:[%s4] sm:$0x3]
  %v194 = vperm.slane %v192, 0
  %v195 = vperm.slane %v192, 1
  %v230 = vunpack.c.l.b16 %v160
  %v231 = vunpack.c.h.b16 %v160
  %v232 = vunpack.c.l.b16 %v161
  %v233 = vunpack.c.h.b16 %v161
  %v234 = vunpack.c.l.b16 %v162
  %v235 = vunpack.c.h.b16 %v162
  %v236 = vunpack.c.l.b16 %v163
  %v237 = vunpack.c.h.b16 %v163
  %v238 = vunpack.c.l.b16 %v164
  %v239 = vunpack.c.h.b16 %v164
  %v240 = vunpack.c.l.b16 %v165
  %v241 = vunpack.c.h.b16 %v165
  %v242 = vunpack.c.l.b16 %v166
  %v243 = vunpack.c.h.b16 %v166
  %v244 = vunpack.c.l.b16 %v167
  %v245 = vunpack.c.h.b16 %v167
  %v246 = vunpack.c.l.b16 %v168
  %v247 = vunpack.c.h.b16 %v168
  %v248 = vunpack.c.l.b16 %v169
  %v249 = vunpack.c.h.b16 %v169
  %v250 = vunpack.c.l.b16 %v170
  %v251 = vunpack.c.h.b16 %v170
  %v252 = vunpack.c.l.b16 %v171
  %v253 = vunpack.c.h.b16 %v171
  %v254 = vunpack.c.l.b16 %v172
  %v255 = vunpack.c.h.b16 %v172
  %v256 = vunpack.c.l.b16 %v173
  %v257 = vunpack.c.h.b16 %v173
  %v258 = vunpack.c.l.b16 %v174
  %v259 = vunpack.c.h.b16 %v174
  %v260 = vunpack.c.l.b16 %v175
  %v261 = vunpack.c.h.b16 %v175
  %v262 = vunpack.c.l.b16 %v176
  %v263 = vunpack.c.h.b16 %v176
  %v264 = vunpack.c.l.b16 %v177
  %v265 = vunpack.c.h.b16 %v177
  %v266 = vunpack.c.l.b16 %v178
  %v267 = vunpack.c.h.b16 %v178
  %v268 = vunpack.c.l.b16 %v179
  %v269 = vunpack.c.h.b16 %v179
  %v270 = vunpack.c.l.b16 %v180
  %v271 = vunpack.c.h.b16 %v180
  %v272 = vunpack.c.l.b16 %v181
  %v273 = vunpack.c.h.b16 %v181
  %v274 = vunpack.c.l.b16 %v182
  %v275 = vunpack.c.h.b16 %v182
  %v276 = vunpack.c.l.b16 %v183
  %v277 = vunpack.c.h.b16 %v183
  %v278 = vunpack.c.l.b16 %v184
  %v279 = vunpack.c.h.b16 %v184
  %v280 = vunpack.c.l.b16 %v185
  %v281 = vunpack.c.h.b16 %v185
  %v282 = vunpack.c.l.b16 %v186
  %v283 = vunpack.c.h.b16 %v186
  %v284 = vunpack.c.l.b16 %v187
  %v285 = vunpack.c.h.b16 %v187
  %v286 = vunpack.c.l.b16 %v188
  %v287 = vunpack.c.h.b16 %v188
  %v288 = vunpack.c.l.b16 %v189
  %v289 = vunpack.c.h.b16 %v189
  %v290 = vunpack.c.l.b16 %v190
  %v291 = vunpack.c.h.b16 %v190
  %v292 = vunpack.c.l.b16 %v191
  %v293 = vunpack.c.h.b16 %v191
  %v294 = vpack.c.b16 %v232, %v230
  %v295 = vpack.c.b16 %v233, %v231
  %v296 = vpack.c.b16 %v236, %v234
  %v297 = vpack.c.b16 %v237, %v235
  %v298 = vpack.c.b16 %v240, %v238
  %v299 = vpack.c.b16 %v241, %v239
  %v300 = vpack.c.b16 %v244, %v242
  %v301 = vpack.c.b16 %v245, %v243
  %v302 = vpack.c.b16 %v248, %v246
  %v303 = vpack.c.b16 %v249, %v247
  %v304 = vpack.c.b16 %v252, %v250
  %v305 = vpack.c.b16 %v253, %v251
  %v306 = vpack.c.b16 %v256, %v254
  %v307 = vpack.c.b16 %v257, %v255
  %v308 = vpack.c.b16 %v260, %v258
  %v309 = vpack.c.b16 %v261, %v259
  %v310 = vpack.c.b16 %v264, %v262
  %v311 = vpack.c.b16 %v265, %v263
  %v312 = vpack.c.b16 %v268, %v266
  %v313 = vpack.c.b16 %v269, %v267
  %v314 = vpack.c.b16 %v272, %v270
  %v315 = vpack.c.b16 %v273, %v271
  %v316 = vpack.c.b16 %v276, %v274
  %v317 = vpack.c.b16 %v277, %v275
  %v318 = vpack.c.b16 %v280, %v278
  %v319 = vpack.c.b16 %v281, %v279
  %v320 = vpack.c.b16 %v284, %v282
  %v321 = vpack.c.b16 %v285, %v283
  %v322 = vpack.c.b16 %v288, %v286
  %v323 = vpack.c.b16 %v289, %v287
  %v324 = vpack.c.b16 %v292, %v290
  %v325 = vpack.c.b16 %v293, %v291
  %358 = vmatpush.bf16.msra.mxu0 %v308
  %359 = vmatpush.bf16.msra.mxu0 %v306
  %360 = vmatpush.bf16.msra.mxu0 %v304
  %361 = vmatpush.bf16.msra.mxu0 %v302
  %362 = vmatpush.bf16.msra.mxu0 %v300
  %363 = vmatpush.bf16.msra.mxu0 %v298
  %364 = vmatpush.bf16.msra.mxu0 %v296
  %365 = vmatpush.bf16.msra.mxu0 %v294
  %366 = vmatmul.bf16.gmra.mxu0 %v158
  %v367 = vpop.f32.mrf.mxu0
  %v368 = vadd.f32 %v194, %v367
  %v369 = vpop.f32.mrf.mxu0
  %370 = vdwg.mxu0
  %371 = vmatpush.bf16.msra.mxu0 %v324
  %372 = vmatpush.bf16.msra.mxu0 %v322
  %373 = vmatpush.bf16.msra.mxu0 %v320
  %374 = vmatpush.bf16.msra.mxu0 %v318
  %375 = vmatpush.bf16.msra.mxu0 %v316
  %376 = vmatpush.bf16.msra.mxu0 %v314
  %377 = vmatpush.bf16.msra.mxu0 %v312
  %378 = vmatpush.bf16.msra.mxu0 %v310
  %379 = vmatmul.bf16.gmra.mxu0 %v159
  %v380 = vpop.f32.mrf.mxu0
  %v381 = vadd.f32 %v368, %v380
  %v382 = vpop.f32.mrf.mxu0
  %383 = vdwg.mxu0
  %384 = vmatpush.bf16.msra.mxu0 %v309
  %385 = vmatpush.bf16.msra.mxu0 %v307
  %386 = vmatpush.bf16.msra.mxu0 %v305
  %387 = vmatpush.bf16.msra.mxu0 %v303
  %388 = vmatpush.bf16.msra.mxu0 %v301
  %389 = vmatpush.bf16.msra.mxu0 %v299
  %390 = vmatpush.bf16.msra.mxu0 %v297
  %391 = vmatpush.bf16.msra.mxu0 %v295
  %392 = vmatmul.bf16.gmra.mxu0 %v158
  %v393 = vpop.f32.mrf.mxu0
  %v394 = vadd.f32 %v195, %v393
  %v395 = vpop.f32.mrf.mxu0
  %396 = vdwg.mxu0
  %397 = vmatpush.bf16.msra.mxu0 %v325
  %398 = vmatpush.bf16.msra.mxu0 %v323
  %399 = vmatpush.bf16.msra.mxu0 %v321
  %400 = vmatpush.bf16.msra.mxu0 %v319
  %401 = vmatpush.bf16.msra.mxu0 %v317
  %402 = vmatpush.bf16.msra.mxu0 %v315
  %403 = vmatpush.bf16.msra.mxu0 %v313
  %404 = vmatpush.bf16.msra.mxu0 %v311
  %405 = vmatmul.bf16.gmra.mxu0 %v159
  %v406 = vpop.f32.mrf.mxu0
  %v407 = vadd.f32 %v394, %v406
  %v408 = vpop.f32.mrf.mxu0
  %409 = vdwg.mxu0
  %v410 = vtanh.pop %v381
  %v411 = vtanh.pop %v407
  %v412 = vpack.c.bf16 %v410, %v410
  %v413 = vpack.c.bf16 %v411, %v411
  %v414 = vld [vmem:[%s5] sm:$0xf]
  %v415 = vld [vmem:[%s5 + $0x4] sm:$0xf]
  %v416 = vld [vmem:[%s5 + $0x8] sm:$0xf]
  %v417 = vld [vmem:[%s5 + $0xc] sm:$0xf]
  %v418 = vld [vmem:[%s5 + $0x10] sm:$0xf]
  %v419 = vld [vmem:[%s5 + $0x14] sm:$0xf]
  %v420 = vld [vmem:[%s5 + $0x18] sm:$0xf]
  %v421 = vld [vmem:[%s5 + $0x1c] sm:$0xf]
  %v422 = vld [vmem:[%s5 + $0x20] sm:$0xf]
  %v423 = vld [vmem:[%s5 + $0x24] sm:$0xf]
  %v424 = vld [vmem:[%s5 + $0x28] sm:$0xf]
  %v425 = vld [vmem:[%s5 + $0x2c] sm:$0xf]
  %v426 = vld [vmem:[%s5 + $0x30] sm:$0xf]
  %v427 = vld [vmem:[%s5 + $0x34] sm:$0xf]
  %v428 = vld [vmem:[%s5 + $0x38] sm:$0xf]
  %v429 = vld [vmem:[%s5 + $0x3c] sm:$0xf]
  %v430 = vld [vmem:[%s5 + $0x40] sm:$0xf]
  %v431 = vld [vmem:[%s5 + $0x44] sm:$0xf]
  %v432 = vld [vmem:[%s5 + $0x48] sm:$0xf]
  %v433 = vld [vmem:[%s5 + $0x4c] sm:$0xf]
  %v434 = vld [vmem:[%s5 + $0x50] sm:$0xf]
  %v435 = vld [vmem:[%s5 + $0x54] sm:$0xf]
  %v436 = vld [vmem:[%s5 + $0x58] sm:$0xf]
  %v437 = vld [vmem:[%s5 + $0x5c] sm:$0xf]
  %v438 = vld [vmem:[%s5 + $0x60] sm:$0xf]
  %v439 = vld [vmem:[%s5 + $0x64] sm:$0xf]
  %v440 = vld [vmem:[%s5 + $0x68] sm:$0xf]
  %v441 = vld [vmem:[%s5 + $0x6c] sm:$0xf]
  %v442 = vld [vmem:[%s5 + $0x70] sm:$0xf]
  %v443 = vld [vmem:[%s5 + $0x74] sm:$0xf]
  %v444 = vld [vmem:[%s5 + $0x78] sm:$0xf]
  %v445 = vld [vmem:[%s5 + $0x7c] sm:$0xf]
  %v446 = vld [vmem:[%s6] sm:$0x1]
  %v448 = vperm.slane %v446, 0
  %v482 = vunpack.c.l.b16 %v414
  %v483 = vunpack.c.l.b16 %v415
  %v484 = vunpack.c.l.b16 %v416
  %v485 = vunpack.c.l.b16 %v417
  %v486 = vunpack.c.l.b16 %v418
  %v487 = vunpack.c.l.b16 %v419
  %v488 = vunpack.c.l.b16 %v420
  %v489 = vunpack.c.l.b16 %v421
  %v490 = vunpack.c.l.b16 %v422
  %v491 = vunpack.c.l.b16 %v423
  %v492 = vunpack.c.l.b16 %v424
  %v493 = vunpack.c.l.b16 %v425
  %v494 = vunpack.c.l.b16 %v426
  %v495 = vunpack.c.l.b16 %v427
  %v496 = vunpack.c.l.b16 %v428
  %v497 = vunpack.c.l.b16 %v429
  %v498 = vunpack.c.l.b16 %v430
  %v499 = vunpack.c.l.b16 %v431
  %v500 = vunpack.c.l.b16 %v432
  %v501 = vunpack.c.l.b16 %v433
  %v502 = vunpack.c.l.b16 %v434
  %v503 = vunpack.c.l.b16 %v435
  %v504 = vunpack.c.l.b16 %v436
  %v505 = vunpack.c.l.b16 %v437
  %v506 = vunpack.c.l.b16 %v438
  %v507 = vunpack.c.l.b16 %v439
  %v508 = vunpack.c.l.b16 %v440
  %v509 = vunpack.c.l.b16 %v441
  %v510 = vunpack.c.l.b16 %v442
  %v511 = vunpack.c.l.b16 %v443
  %v512 = vunpack.c.l.b16 %v444
  %v513 = vunpack.c.l.b16 %v445
  %v514 = vpack.c.b16 %v483, %v482
  %v515 = vpack.c.b16 %v485, %v484
  %v516 = vpack.c.b16 %v487, %v486
  %v517 = vpack.c.b16 %v489, %v488
  %v518 = vpack.c.b16 %v491, %v490
  %v519 = vpack.c.b16 %v493, %v492
  %v520 = vpack.c.b16 %v495, %v494
  %v521 = vpack.c.b16 %v497, %v496
  %v522 = vpack.c.b16 %v499, %v498
  %v523 = vpack.c.b16 %v501, %v500
  %v524 = vpack.c.b16 %v503, %v502
  %v525 = vpack.c.b16 %v505, %v504
  %v526 = vpack.c.b16 %v507, %v506
  %v527 = vpack.c.b16 %v509, %v508
  %v528 = vpack.c.b16 %v511, %v510
  %v529 = vpack.c.b16 %v513, %v512
  %546 = vmatpush.bf16.msra.mxu0 %v521
  %547 = vmatpush.bf16.msra.mxu0 %v520
  %548 = vmatpush.bf16.msra.mxu0 %v519
  %549 = vmatpush.bf16.msra.mxu0 %v518
  %550 = vmatpush.bf16.msra.mxu0 %v517
  %551 = vmatpush.bf16.msra.mxu0 %v516
  %552 = vmatpush.bf16.msra.mxu0 %v515
  %553 = vmatpush.bf16.msra.mxu0 %v514
  %554 = vmatmul.bf16.gmra.mxu0 %v412
  %v555 = vpop.f32.mrf.mxu0
  %v556 = vadd.f32 %v448, %v555
  %v557 = vpop.f32.mrf.mxu0
  %558 = vdwg.mxu0
  %559 = vmatpush.bf16.msra.mxu0 %v529
  %560 = vmatpush.bf16.msra.mxu0 %v528
  %561 = vmatpush.bf16.msra.mxu0 %v527
  %562 = vmatpush.bf16.msra.mxu0 %v526
  %563 = vmatpush.bf16.msra.mxu0 %v525
  %564 = vmatpush.bf16.msra.mxu0 %v524
  %565 = vmatpush.bf16.msra.mxu0 %v523
  %566 = vmatpush.bf16.msra.mxu0 %v522
  %567 = vmatmul.bf16.gmra.mxu0 %v413
  %v568 = vpop.f32.mrf.mxu0
  %v569 = vadd.f32 %v556, %v568
  %v570 = vpop.f32.mrf.mxu0
  %571 = vdwg.mxu0
  %vm572 = vcmask 261120
  %573 = vst.msk [vmem:[%s7] sm:$0xff] %vm572, %v569
  // Predicated region
  $region30: #{_mlp_forward.1} parent=0 // pred_check
    _
  $region31: #{_mlp_forward.1} parent=0 // pred_check_branch
    %575 = sbr.rel (0) target = $region33
  $region32: #{_mlp_forward.1} parent=0 // pred_region
    _
  $region33: #{_mlp_forward.1} parent=0 // pred_fallthru
    _
  // Predicated region
  $region34: #{_mlp_forward.1} parent=0 // pred_check
    _
  $region35: #{_mlp_forward.1} parent=0 // pred_check_branch
    %577 = sbr.rel (0) target = $region37
  $region36: #{_mlp_forward.1} parent=0 // pred_region
    _
  $region37: #{_mlp_forward.1} parent=0 // pred_fallthru
    _

// kernel: _mlp_forward.1
$region0: #{_mlp_forward.1}
  #allocation0 [shape = 'u32[]', space=smem, size = 0x4, offset = 0x4, fixed_abs, tag = 'smem constant byte address 0x4 - core index']
  #allocation1 [shape = 'u32[72,128]{1,0:T(1,128)}', space=vmem, size = 0x9000, scoped, tag = 'internal scratch']
  %s0 = inlined_call_operand.vmem [shape: f32[8,128], index: 0, kind: input, shape index: {}]
  %s1 = inlined_call_operand.vmem [shape: bf16[128,256], index: 1, kind: input, shape index: {}]
  %s2 = inlined_call_operand.vmem [shape: f32[1,256], index: 2, kind: input, shape index: {}]
  %s3 = inlined_call_operand.vmem [shape: bf16[256,256], index: 3, kind: input, shape index: {}]
  %s4 = inlined_call_operand.vmem [shape: f32[1,256], index: 4, kind: input, shape index: {}]
  %s5 = inlined_call_operand.vmem [shape: bf16[256,32], index: 5, kind: input, shape index: {}]
  %s6 = inlined_call_operand.vmem [shape: f32[1,32], index: 6, kind: input, shape index: {}]
  %s7 = inlined_call_operand.vmem [shape: f32[8,32], index: 7, kind: output, shape index: {}]
  %s8 = sld [smem:[#allocation0]]
  $region38: #{_mlp_forward.1} parent=0
    _
  %s10 = ssub.s32 1, %s8
  %s11 = scalar_select 0, %s10, %s8
  // Predicated region
  $region2: #{_mlp_forward.1} parent=0 // pred_check
    _
  $region3: #{_mlp_forward.1} parent=0 // pred_check_branch
    %13 = sbr.rel (0) target = $region5
  $region4: #{_mlp_forward.1} parent=0 // pred_region
    _
  $region5: #{_mlp_forward.1} parent=0 // pred_fallthru
    _
  // Predicated region
  $region6: #{_mlp_forward.1} parent=0 // pred_check
    _
  $region7: #{_mlp_forward.1} parent=0 // pred_check_branch
    %15 = sbr.rel (0) target = $region9
  $region8: #{_mlp_forward.1} parent=0 // pred_region
    _
  $region9: #{_mlp_forward.1} parent=0 // pred_fallthru
    _
  // Predicated region
  $region10: #{_mlp_forward.1} parent=0 // pred_check
    _
  $region11: #{_mlp_forward.1} parent=0 // pred_check_branch
    %17 = sbr.rel (0) target = $region13
  $region12: #{_mlp_forward.1} parent=0 // pred_region
    _
  $region13: #{_mlp_forward.1} parent=0 // pred_fallthru
    _
  // Predicated region
  $region14: #{_mlp_forward.1} parent=0 // pred_check
    _
  $region15: #{_mlp_forward.1} parent=0 // pred_check_branch
    %19 = sbr.rel (0) target = $region17
  $region16: #{_mlp_forward.1} parent=0 // pred_region
    _
  $region17: #{_mlp_forward.1} parent=0 // pred_fallthru
    _
  // Predicated region
  $region18: #{_mlp_forward.1} parent=0 // pred_check
    _
  $region19: #{_mlp_forward.1} parent=0 // pred_check_branch
    %21 = sbr.rel (0) target = $region21
  $region20: #{_mlp_forward.1} parent=0 // pred_region
    _
  $region21: #{_mlp_forward.1} parent=0 // pred_fallthru
    _
  // Predicated region
  $region22: #{_mlp_forward.1} parent=0 // pred_check
    _
  $region23: #{_mlp_forward.1} parent=0 // pred_check_branch
    %23 = sbr.rel (0) target = $region25
  $region24: #{_mlp_forward.1} parent=0 // pred_region
    _
  $region25: #{_mlp_forward.1} parent=0 // pred_fallthru
    _
  // Predicated region
  $region26: #{_mlp_forward.1} parent=0 // pred_check
    _
  $region27: #{_mlp_forward.1} parent=0 // pred_check_branch
    %25 = sbr.rel (0) target = $region29
  $region28: #{_mlp_forward.1} parent=0 // pred_region
    _
  $region29: #{_mlp_forward.1} parent=0 // pred_fallthru
    _
  %v26 = vld [vmem:[%s0] sm:$0xff]
  %v27 = vpack.c.bf16 %v26, %v26
  %v28 = vld [vmem:[%s1] sm:$0xff]
  %v29 = vld [vmem:[%s1 + $0x8] sm:$0xff]
  %v30 = vld [vmem:[%s1 + $0x10] sm:$0xff]
  %v31 = vld [vmem:[%s1 + $0x18] sm:$0xff]
  %v32 = vld [vmem:[%s1 + $0x20] sm:$0xff]
  %v33 = vld [vmem:[%s1 + $0x28] sm:$0xff]
  %v34 = vld [vmem:[%s1 + $0x30] sm:$0xff]
  %v35 = vld [vmem:[%s1 + $0x38] sm:$0xff]
  %v36 = vld [vmem:[%s1 + $0x40] sm:$0xff]
  %v37 = vld [vmem:[%s1 + $0x48] sm:$0xff]
  %v38 = vld [vmem:[%s1 + $0x50] sm:$0xff]
  %v39 = vld [vmem:[%s1 + $0x58] sm:$0xff]
  %v40 = vld [vmem:[%s1 + $0x60] sm:$0xff]
  %v41 = vld [vmem:[%s1 + $0x68] sm:$0xff]
  %v42 = vld [vmem:[%s1 + $0x70] sm:$0xff]
  %v43 = vld [vmem:[%s1 + $0x78] sm:$0xff]
  %v44 = vld [vmem:[%s2] sm:$0x3]
  %v46 = vperm.slane %v44, 0
  %v47 = vperm.slane %v44, 1
  %v66 = vunpack.c.l.b16 %v28
  %v67 = vunpack.c.h.b16 %v28
  %v68 = vunpack.c.l.b16 %v29
  %v69 = vunpack.c.h.b16 %v29
  %v70 = vunpack.c.l.b16 %v30
  %v71 = vunpack.c.h.b16 %v30
  %v72 = vunpack.c.l.b16 %v31
  %v73 = vunpack.c.h.b16 %v31
  %v74 = vunpack.c.l.b16 %v32
  %v75 = vunpack.c.h.b16 %v32
  %v76 = vunpack.c.l.b16 %v33
  %v77 = vunpack.c.h.b16 %v33
  %v78 = vunpack.c.l.b16 %v34
  %v79 = vunpack.c.h.b16 %v34
  %v80 = vunpack.c.l.b16 %v35
  %v81 = vunpack.c.h.b16 %v35
  %v82 = vunpack.c.l.b16 %v36
  %v83 = vunpack.c.h.b16 %v36
  %v84 = vunpack.c.l.b16 %v37
  %v85 = vunpack.c.h.b16 %v37
  %v86 = vunpack.c.l.b16 %v38
  %v87 = vunpack.c.h.b16 %v38
  %v88 = vunpack.c.l.b16 %v39
  %v89 = vunpack.c.h.b16 %v39
  %v90 = vunpack.c.l.b16 %v40
  %v91 = vunpack.c.h.b16 %v40
  %v92 = vunpack.c.l.b16 %v41
  %v93 = vunpack.c.h.b16 %v41
  %v94 = vunpack.c.l.b16 %v42
  %v95 = vunpack.c.h.b16 %v42
  %v96 = vunpack.c.l.b16 %v43
  %v97 = vunpack.c.h.b16 %v43
  %v98 = vpack.c.b16 %v68, %v66
  %v99 = vpack.c.b16 %v69, %v67
  %v100 = vpack.c.b16 %v72, %v70
  %v101 = vpack.c.b16 %v73, %v71
  %v102 = vpack.c.b16 %v76, %v74
  %v103 = vpack.c.b16 %v77, %v75
  %v104 = vpack.c.b16 %v80, %v78
  %v105 = vpack.c.b16 %v81, %v79
  %v106 = vpack.c.b16 %v84, %v82
  %v107 = vpack.c.b16 %v85, %v83
  %v108 = vpack.c.b16 %v88, %v86
  %v109 = vpack.c.b16 %v89, %v87
  %v110 = vpack.c.b16 %v92, %v90
  %v111 = vpack.c.b16 %v93, %v91
  %v112 = vpack.c.b16 %v96, %v94
  %v113 = vpack.c.b16 %v97, %v95
  %130 = vmatpush.bf16.msra.mxu0 %v112
  %131 = vmatpush.bf16.msra.mxu0 %v110
  %132 = vmatpush.bf16.msra.mxu0 %v108
  %133 = vmatpush.bf16.msra.mxu0 %v106
  %134 = vmatpush.bf16.msra.mxu0 %v104
  %135 = vmatpush.bf16.msra.mxu0 %v102
  %136 = vmatpush.bf16.msra.mxu0 %v100
  %137 = vmatpush.bf16.msra.mxu0 %v98
  %138 = vmatmul.bf16.gmra.mxu0 %v27
  %v139 = vpop.f32.mrf.mxu0
  %v140 = vadd.f32 %v46, %v139
  %v141 = vpop.f32.mrf.mxu0
  %142 = vdwg.mxu0
  %143 = vmatpush.bf16.msra.mxu0 %v113
  %144 = vmatpush.bf16.msra.mxu0 %v111
  %145 = vmatpush.bf16.msra.mxu0 %v109
  %146 = vmatpush.bf16.msra.mxu0 %v107
  %147 = vmatpush.bf16.msra.mxu0 %v105
  %148 = vmatpush.bf16.msra.mxu0 %v103
  %149 = vmatpush.bf16.msra.mxu0 %v101
  %150 = vmatpush.bf16.msra.mxu0 %v99
  %151 = vmatmul.bf16.gmra.mxu0 %v27
  %v152 = vpop.f32.mrf.mxu0
  %v153 = vadd.f32 %v47, %v152
  %v154 = vpop.f32.mrf.mxu0
  %155 = vdwg.mxu0
  %v156 = vtanh.pop %v140
  %v157 = vtanh.pop %v153
  %v158 = vpack.c.bf16 %v156, %v156
  %v159 = vpack.c.bf16 %v157, %v157
  %v160 = vld [vmem:[%s3] sm:$0xff]
  %v161 = vld [vmem:[%s3 + $0x8] sm:$0xff]
  %v162 = vld [vmem:[%s3 + $0x10] sm:$0xff]
  %v163 = vld [vmem:[%s3 + $0x18] sm:$0xff]
  %v164 = vld [vmem:[%s3 + $0x20] sm:$0xff]
  %v165 = vld [vmem:[%s3 + $0x28] sm:$0xff]
  %v166 = vld [vmem:[%s3 + $0x30] sm:$0xff]
  %v167 = vld [vmem:[%s3 + $0x38] sm:$0xff]
  %v168 = vld [vmem:[%s3 + $0x40] sm:$0xff]
  %v169 = vld [vmem:[%s3 + $0x48] sm:$0xff]
  %v170 = vld [vmem:[%s3 + $0x50] sm:$0xff]
  %v171 = vld [vmem:[%s3 + $0x58] sm:$0xff]
  %v172 = vld [vmem:[%s3 + $0x60] sm:$0xff]
  %v173 = vld [vmem:[%s3 + $0x68] sm:$0xff]
  %v174 = vld [vmem:[%s3 + $0x70] sm:$0xff]
  %v175 = vld [vmem:[%s3 + $0x78] sm:$0xff]
  %v176 = vld [vmem:[%s3 + $0x80] sm:$0xff]
  %v177 = vld [vmem:[%s3 + $0x88] sm:$0xff]
  %v178 = vld [vmem:[%s3 + $0x90] sm:$0xff]
  %v179 = vld [vmem:[%s3 + $0x98] sm:$0xff]
  %v180 = vld [vmem:[%s3 + $0xa0] sm:$0xff]
  %v181 = vld [vmem:[%s3 + $0xa8] sm:$0xff]
  %v182 = vld [vmem:[%s3 + $0xb0] sm:$0xff]
  %v183 = vld [vmem:[%s3 + $0xb8] sm:$0xff]
  %v184 = vld [vmem:[%s3 + $0xc0] sm:$0xff]
  %v185 = vld [vmem:[%s3 + $0xc8] sm:$0xff]
  %v186 = vld [vmem:[%s3 + $0xd0] sm:$0xff]
  %v187 = vld [vmem:[%s3 + $0xd8] sm:$0xff]
  %v188 = vld [vmem:[%s3 + $0xe0] sm:$0xff]
  %v189 = vld [vmem:[%s3 + $0xe8] sm:$0xff]
  %v190 = vld [vmem:[%s3 + $0xf0] sm:$0xff]
  %v191 = vld [vmem:[%s3 + $0xf8] sm:$0xff]
  %v192 = vld [vmem:[%s4] sm:$0x3]
  %v194 = vperm.slane %v192, 0
  %v195 = vperm.slane %v192, 1
  %v230 = vunpack.c.l.b16 %v160
  %v231 = vunpack.c.h.b16 %v160
  %v232 = vunpack.c.l.b16 %v161
  %v233 = vunpack.c.h.b16 %v161
  %v234 = vunpack.c.l.b16 %v162
  %v235 = vunpack.c.h.b16 %v162
  %v236 = vunpack.c.l.b16 %v163
  %v237 = vunpack.c.h.b16 %v163
  %v238 = vunpack.c.l.b16 %v164
  %v239 = vunpack.c.h.b16 %v164
  %v240 = vunpack.c.l.b16 %v165
  %v241 = vunpack.c.h.b16 %v165
  %v242 = vunpack.c.l.b16 %v166
  %v243 = vunpack.c.h.b16 %v166
  %v244 = vunpack.c.l.b16 %v167
  %v245 = vunpack.c.h.b16 %v167
  %v246 = vunpack.c.l.b16 %v168
  %v247 = vunpack.c.h.b16 %v168
  %v248 = vunpack.c.l.b16 %v169
  %v249 = vunpack.c.h.b16 %v169
  %v250 = vunpack.c.l.b16 %v170
  %v251 = vunpack.c.h.b16 %v170
  %v252 = vunpack.c.l.b16 %v171
  %v253 = vunpack.c.h.b16 %v171
  %v254 = vunpack.c.l.b16 %v172
  %v255 = vunpack.c.h.b16 %v172
  %v256 = vunpack.c.l.b16 %v173
  %v257 = vunpack.c.h.b16 %v173
  %v258 = vunpack.c.l.b16 %v174
  %v259 = vunpack.c.h.b16 %v174
  %v260 = vunpack.c.l.b16 %v175
  %v261 = vunpack.c.h.b16 %v175
  %v262 = vunpack.c.l.b16 %v176
  %v263 = vunpack.c.h.b16 %v176
  %v264 = vunpack.c.l.b16 %v177
  %v265 = vunpack.c.h.b16 %v177
  %v266 = vunpack.c.l.b16 %v178
  %v267 = vunpack.c.h.b16 %v178
  %v268 = vunpack.c.l.b16 %v179
  %v269 = vunpack.c.h.b16 %v179
  %v270 = vunpack.c.l.b16 %v180
  %v271 = vunpack.c.h.b16 %v180
  %v272 = vunpack.c.l.b16 %v181
  %v273 = vunpack.c.h.b16 %v181
  %v274 = vunpack.c.l.b16 %v182
  %v275 = vunpack.c.h.b16 %v182
  %v276 = vunpack.c.l.b16 %v183
  %v277 = vunpack.c.h.b16 %v183
  %v278 = vunpack.c.l.b16 %v184
  %v279 = vunpack.c.h.b16 %v184
  %v280 = vunpack.c.l.b16 %v185
  %v281 = vunpack.c.h.b16 %v185
  %v282 = vunpack.c.l.b16 %v186
  %v283 = vunpack.c.h.b16 %v186
  %v284 = vunpack.c.l.b16 %v187
  %v285 = vunpack.c.h.b16 %v187
  %v286 = vunpack.c.l.b16 %v188
  %v287 = vunpack.c.h.b16 %v188
  %v288 = vunpack.c.l.b16 %v189
  %v289 = vunpack.c.h.b16 %v189
  %v290 = vunpack.c.l.b16 %v190
  %v291 = vunpack.c.h.b16 %v190
  %v292 = vunpack.c.l.b16 %v191
  %v293 = vunpack.c.h.b16 %v191
  %v294 = vpack.c.b16 %v232, %v230
  %v295 = vpack.c.b16 %v233, %v231
  %v296 = vpack.c.b16 %v236, %v234
  %v297 = vpack.c.b16 %v237, %v235
  %v298 = vpack.c.b16 %v240, %v238
  %v299 = vpack.c.b16 %v241, %v239
  %v300 = vpack.c.b16 %v244, %v242
  %v301 = vpack.c.b16 %v245, %v243
  %v302 = vpack.c.b16 %v248, %v246
  %v303 = vpack.c.b16 %v249, %v247
  %v304 = vpack.c.b16 %v252, %v250
  %v305 = vpack.c.b16 %v253, %v251
  %v306 = vpack.c.b16 %v256, %v254
  %v307 = vpack.c.b16 %v257, %v255
  %v308 = vpack.c.b16 %v260, %v258
  %v309 = vpack.c.b16 %v261, %v259
  %v310 = vpack.c.b16 %v264, %v262
  %v311 = vpack.c.b16 %v265, %v263
  %v312 = vpack.c.b16 %v268, %v266
  %v313 = vpack.c.b16 %v269, %v267
  %v314 = vpack.c.b16 %v272, %v270
  %v315 = vpack.c.b16 %v273, %v271
  %v316 = vpack.c.b16 %v276, %v274
  %v317 = vpack.c.b16 %v277, %v275
  %v318 = vpack.c.b16 %v280, %v278
  %v319 = vpack.c.b16 %v281, %v279
  %v320 = vpack.c.b16 %v284, %v282
  %v321 = vpack.c.b16 %v285, %v283
  %v322 = vpack.c.b16 %v288, %v286
  %v323 = vpack.c.b16 %v289, %v287
  %v324 = vpack.c.b16 %v292, %v290
  %v325 = vpack.c.b16 %v293, %v291
  %358 = vmatpush.bf16.msra.mxu0 %v308
  %359 = vmatpush.bf16.msra.mxu0 %v306
  %360 = vmatpush.bf16.msra.mxu0 %v304
  %361 = vmatpush.bf16.msra.mxu0 %v302
  %362 = vmatpush.bf16.msra.mxu0 %v300
  %363 = vmatpush.bf16.msra.mxu0 %v298
  %364 = vmatpush.bf16.msra.mxu0 %v296
  %365 = vmatpush.bf16.msra.mxu0 %v294
  %366 = vmatmul.bf16.gmra.mxu0 %v158
  %v367 = vpop.f32.mrf.mxu0
  %v368 = vadd.f32 %v194, %v367
  %v369 = vpop.f32.mrf.mxu0
  %370 = vdwg.mxu0
  %371 = vmatpush.bf16.msra.mxu0 %v324
  %372 = vmatpush.bf16.msra.mxu0 %v322
  %373 = vmatpush.bf16.msra.mxu0 %v320
  %374 = vmatpush.bf16.msra.mxu0 %v318
  %375 = vmatpush.bf16.msra.mxu0 %v316
  %376 = vmatpush.bf16.msra.mxu0 %v314
  %377 = vmatpush.bf16.msra.mxu0 %v312
  %378 = vmatpush.bf16.msra.mxu0 %v310
  %379 = vmatmul.bf16.gmra.mxu0 %v159
  %v380 = vpop.f32.mrf.mxu0
  %v381 = vadd.f32 %v368, %v380
  %v382 = vpop.f32.mrf.mxu0
  %383 = vdwg.mxu0
  %384 = vmatpush.bf16.msra.mxu0 %v309
  %385 = vmatpush.bf16.msra.mxu0 %v307
  %386 = vmatpush.bf16.msra.mxu0 %v305
  %387 = vmatpush.bf16.msra.mxu0 %v303
  %388 = vmatpush.bf16.msra.mxu0 %v301
  %389 = vmatpush.bf16.msra.mxu0 %v299
  %390 = vmatpush.bf16.msra.mxu0 %v297
  %391 = vmatpush.bf16.msra.mxu0 %v295
  %392 = vmatmul.bf16.gmra.mxu0 %v158
  %v393 = vpop.f32.mrf.mxu0
  %v394 = vadd.f32 %v195, %v393
  %v395 = vpop.f32.mrf.mxu0
  %396 = vdwg.mxu0
  %397 = vmatpush.bf16.msra.mxu0 %v325
  %398 = vmatpush.bf16.msra.mxu0 %v323
  %399 = vmatpush.bf16.msra.mxu0 %v321
  %400 = vmatpush.bf16.msra.mxu0 %v319
  %401 = vmatpush.bf16.msra.mxu0 %v317
  %402 = vmatpush.bf16.msra.mxu0 %v315
  %403 = vmatpush.bf16.msra.mxu0 %v313
  %404 = vmatpush.bf16.msra.mxu0 %v311
  %405 = vmatmul.bf16.gmra.mxu0 %v159
  %v406 = vpop.f32.mrf.mxu0
  %v407 = vadd.f32 %v394, %v406
  %v408 = vpop.f32.mrf.mxu0
  %409 = vdwg.mxu0
  %v410 = vtanh.pop %v381
  %v411 = vtanh.pop %v407
  %v412 = vpack.c.bf16 %v410, %v410
  %v413 = vpack.c.bf16 %v411, %v411
  %v414 = vld [vmem:[%s5] sm:$0xf]
  %v415 = vld [vmem:[%s5 + $0x4] sm:$0xf]
  %v416 = vld [vmem:[%s5 + $0x8] sm:$0xf]
  %v417 = vld [vmem:[%s5 + $0xc] sm:$0xf]
  %v418 = vld [vmem:[%s5 + $0x10] sm:$0xf]
  %v419 = vld [vmem:[%s5 + $0x14] sm:$0xf]
  %v420 = vld [vmem:[%s5 + $0x18] sm:$0xf]
  %v421 = vld [vmem:[%s5 + $0x1c] sm:$0xf]
  %v422 = vld [vmem:[%s5 + $0x20] sm:$0xf]
  %v423 = vld [vmem:[%s5 + $0x24] sm:$0xf]
  %v424 = vld [vmem:[%s5 + $0x28] sm:$0xf]
  %v425 = vld [vmem:[%s5 + $0x2c] sm:$0xf]
  %v426 = vld [vmem:[%s5 + $0x30] sm:$0xf]
  %v427 = vld [vmem:[%s5 + $0x34] sm:$0xf]
  %v428 = vld [vmem:[%s5 + $0x38] sm:$0xf]
  %v429 = vld [vmem:[%s5 + $0x3c] sm:$0xf]
  %v430 = vld [vmem:[%s5 + $0x40] sm:$0xf]
  %v431 = vld [vmem:[%s5 + $0x44] sm:$0xf]
  %v432 = vld [vmem:[%s5 + $0x48] sm:$0xf]
  %v433 = vld [vmem:[%s5 + $0x4c] sm:$0xf]
  %v434 = vld [vmem:[%s5 + $0x50] sm:$0xf]
  %v435 = vld [vmem:[%s5 + $0x54] sm:$0xf]
  %v436 = vld [vmem:[%s5 + $0x58] sm:$0xf]
  %v437 = vld [vmem:[%s5 + $0x5c] sm:$0xf]
  %v438 = vld [vmem:[%s5 + $0x60] sm:$0xf]
  %v439 = vld [vmem:[%s5 + $0x64] sm:$0xf]
  %v440 = vld [vmem:[%s5 + $0x68] sm:$0xf]
  %v441 = vld [vmem:[%s5 + $0x6c] sm:$0xf]
  %v442 = vld [vmem:[%s5 + $0x70] sm:$0xf]
  %v443 = vld [vmem:[%s5 + $0x74] sm:$0xf]
  %v444 = vld [vmem:[%s5 + $0x78] sm:$0xf]
  %v445 = vld [vmem:[%s5 + $0x7c] sm:$0xf]
  %v446 = vld [vmem:[%s6] sm:$0x1]
  %v448 = vperm.slane %v446, 0
  %v482 = vunpack.c.l.b16 %v414
  %v483 = vunpack.c.l.b16 %v415
  %v484 = vunpack.c.l.b16 %v416
  %v485 = vunpack.c.l.b16 %v417
  %v486 = vunpack.c.l.b16 %v418
  %v487 = vunpack.c.l.b16 %v419
  %v488 = vunpack.c.l.b16 %v420
  %v489 = vunpack.c.l.b16 %v421
  %v490 = vunpack.c.l.b16 %v422
  %v491 = vunpack.c.l.b16 %v423
  %v492 = vunpack.c.l.b16 %v424
  %v493 = vunpack.c.l.b16 %v425
  %v494 = vunpack.c.l.b16 %v426
  %v495 = vunpack.c.l.b16 %v427
  %v496 = vunpack.c.l.b16 %v428
  %v497 = vunpack.c.l.b16 %v429
  %v498 = vunpack.c.l.b16 %v430
  %v499 = vunpack.c.l.b16 %v431
  %v500 = vunpack.c.l.b16 %v432
  %v501 = vunpack.c.l.b16 %v433
  %v502 = vunpack.c.l.b16 %v434
  %v503 = vunpack.c.l.b16 %v435
  %v504 = vunpack.c.l.b16 %v436
  %v505 = vunpack.c.l.b16 %v437
  %v506 = vunpack.c.l.b16 %v438
  %v507 = vunpack.c.l.b16 %v439
  %v508 = vunpack.c.l.b16 %v440
  %v509 = vunpack.c.l.b16 %v441
  %v510 = vunpack.c.l.b16 %v442
  %v511 = vunpack.c.l.b16 %v443
  %v512 = vunpack.c.l.b16 %v444
  %v513 = vunpack.c.l.b16 %v445
  %v514 = vpack.c.b16 %v483, %v482
  %v515 = vpack.c.b16 %v485, %v484
  %v516 = vpack.c.b16 %v487, %v486
  %v517 = vpack.c.b16 %v489, %v488
  %v518 = vpack.c.b16 %v491, %v490
  %v519 = vpack.c.b16 %v493, %v492
  %v520 = vpack.c.b16 %v495, %v494
  %v521 = vpack.c.b16 %v497, %v496
  %v522 = vpack.c.b16 %v499, %v498
  %v523 = vpack.c.b16 %v501, %v500
  %v524 = vpack.c.b16 %v503, %v502
  %v525 = vpack.c.b16 %v505, %v504
  %v526 = vpack.c.b16 %v507, %v506
  %v527 = vpack.c.b16 %v509, %v508
  %v528 = vpack.c.b16 %v511, %v510
  %v529 = vpack.c.b16 %v513, %v512
  %546 = vmatpush.bf16.msra.mxu0 %v521
  %547 = vmatpush.bf16.msra.mxu0 %v520
  %548 = vmatpush.bf16.msra.mxu0 %v519
  %549 = vmatpush.bf16.msra.mxu0 %v518
  %550 = vmatpush.bf16.msra.mxu0 %v517
  %551 = vmatpush.bf16.msra.mxu0 %v516
  %552 = vmatpush.bf16.msra.mxu0 %v515
  %553 = vmatpush.bf16.msra.mxu0 %v514
  %554 = vmatmul.bf16.gmra.mxu0 %v412
  %v555 = vpop.f32.mrf.mxu0
  %v556 = vadd.f32 %v448, %v555
  %v557 = vpop.f32.mrf.mxu0
  %558 = vdwg.mxu0
  %559 = vmatpush.bf16.msra.mxu0 %v529
  %560 = vmatpush.bf16.msra.mxu0 %v528
  %561 = vmatpush.bf16.msra.mxu0 %v527
  %562 = vmatpush.bf16.msra.mxu0 %v526
  %563 = vmatpush.bf16.msra.mxu0 %v525
  %564 = vmatpush.bf16.msra.mxu0 %v524
  %565 = vmatpush.bf16.msra.mxu0 %v523
  %566 = vmatpush.bf16.msra.mxu0 %v522
  %567 = vmatmul.bf16.gmra.mxu0 %v413
  %v568 = vpop.f32.mrf.mxu0
  %v569 = vadd.f32 %v556, %v568
  %v570 = vpop.f32.mrf.mxu0
  %571 = vdwg.mxu0
  %vm572 = vcmask 261120
  %573 = vst.msk [vmem:[%s7] sm:$0xff] %vm572, %v569
  // Predicated region
  $region30: #{_mlp_forward.1} parent=0 // pred_check
    _
  $region31: #{_mlp_forward.1} parent=0 // pred_check_branch
    %575 = sbr.rel (0) target = $region33
  $region32: #{_mlp_forward.1} parent=0 // pred_region
    _
  $region33: #{_mlp_forward.1} parent=0 // pred_fallthru
    _
  // Predicated region
  $region34: #{_mlp_forward.1} parent=0 // pred_check
    _
  $region35: #{_mlp_forward.1} parent=0 // pred_check_branch
    %577 = sbr.rel (0) target = $region37
  $region36: #{_mlp_forward.1} parent=0 // pred_region
    _
  $region37: #{_mlp_forward.1} parent=0 // pred_fallthru
    _

</llo_original>
